<compile_context>
chip_gen: v6e
topology: v6e:2x2x1
jax: 0.10.0
libtpu: 0.0.40
codegen_flags: <defaults>
</compile_context>

<pallas_src>
import functools

import jax
import jax.numpy as jnp
from jax import lax
from jax.experimental import pallas as pl
from jax.experimental.pallas import tpu as pltpu


def _round_up(x, m):
    return (x + m - 1) // m * m


def _cdiv(a, b):
    return (a + b - 1) // b


# ---------------------------------------------------------------------------
# Kernel
# ---------------------------------------------------------------------------
def _mlm_head_kernel(x_ref, w1_ref, b1_ref, g_ref, beta_ref, w2_ref, b2_ref,
                     o_ref, h_scratch, *, eps):
    """One grid step: row tile i (axis 0), vocab tile j (axis 1).

    The hidden activations (Linear1 + ReLU + LayerNorm) depend only on the row
    tile, so they are computed once per row tile (at j == 0) and cached in VMEM
    scratch; every vocab tile then only runs the second matmul on the MXU.

    NOTE: this caching is only correct because the vocab axis is the LAST grid
    axis and is marked "arbitrary" (sequential per row tile). Do not reorder
    the grid or mark the j axis "parallel".
    """
    j = pl.program_id(1)

    @pl.when(j == 0)
    def _():
        # Linear(num_inputs -> num_hiddens), f32 accumulation on the MXU.
        h = jnp.dot(x_ref[...], w1_ref[...],
                    preferred_element_type=jnp.float32)
        h = h + b1_ref[...]
        # ReLU
        h = jnp.maximum(h, 0.0)
        # LayerNorm over the hidden axis (biased variance, torch eps), in f32.
        mean = jnp.mean(h, axis=-1, keepdims=True)
        var = jnp.mean((h - mean) * (h - mean), axis=-1, keepdims=True)
        h = (h - mean) * lax.rsqrt(var + eps)
        h = h * g_ref[...] + beta_ref[...]
        # Store in the matmul dtype (bf16 by default) for the second MXU pass.
        h_scratch[...] = h.astype(h_scratch.dtype)

    # Linear(num_hiddens -> vocab) for this vocab tile, f32 accumulation.
    acc = jnp.dot(h_scratch[...], w2_ref[...],
                  preferred_element_type=jnp.float32)
    o_ref[...] = (acc + b2_ref[...]).astype(o_ref.dtype)


# ---------------------------------------------------------------------------
# One-time weight preparation (hoisted out of the per-call hot path)
# ---------------------------------------------------------------------------
def prepare_mlm_head_params(params, *, vocab_tile=1024,
                            matmul_dtype=jnp.bfloat16):
    """Pad W2/b2 to the vocab tile and cast weights to the MXU dtype, ONCE.

    Doing this per call costs a full f32 read + bf16 write of W2 (~190 MB for
    BERT), which can rival the kernel's own HBM traffic.
    """
    vocab_size = int(params["w2"].shape[1])
    vt = min(int(vocab_tile), _round_up(vocab_size, 128))
    v_pad = _round_up(vocab_size, vt)

    w2, b2 = params["w2"], params["b2"]
    if v_pad != vocab_size:
        w2 = jnp.pad(w2, ((0, 0), (0, v_pad - vocab_size)))
        b2 = jnp.pad(b2, ((0, 0), (0, v_pad - vocab_size)))

    return {
        "w1": params["w1"].astype(matmul_dtype),
        "b1": params["b1"].astype(jnp.float32).reshape(1, -1),
        "gamma": params["gamma"].astype(jnp.float32).reshape(1, -1),
        "beta": params["beta"].astype(jnp.float32).reshape(1, -1),
        "w2": w2.astype(matmul_dtype),
        "b2": b2.astype(jnp.float32).reshape(1, -1),
        "vocab_size": vocab_size,
        "vocab_tile": int(vt),
        "matmul_dtype": jnp.dtype(matmul_dtype),
    }


# ---------------------------------------------------------------------------
# Pallas wrapper for the fused MLP head
# ---------------------------------------------------------------------------
def mlm_head_pallas(masked_x, prep, *, row_tile=None, out_dtype=None, eps=1e-5):
    """masked_x: [M, num_inputs] -> [M, vocab_size] logits (unpadded)."""
    M, num_inputs = masked_x.shape
    num_hiddens = prep["w1"].shape[1]
    vocab_size = prep["vocab_size"]
    vt = prep["vocab_tile"]
    v_pad = prep["w2"].shape[1]
    matmul_dtype = prep["matmul_dtype"]
    # bf16 output by default: the [M, vocab] slab is one of the two dominant
    # HBM streams; f32 writeback would double it.
    out_dtype = matmul_dtype if out_dtype is None else out_dtype

    mm_b = jnp.dtype(matmul_dtype).itemsize
    out_b = jnp.dtype(out_dtype).itemsize

    # VMEM cap: stay well under v7x's 64 MiB physical VMEM (leave room for
    # Mosaic internal scratch / semaphores); v5e/v6e have 128 MiB so the same
    # cap is trivially safe there.
    try:
        cap = int(pltpu.get_tpu_info().vmem_capacity_bytes * 0.75)
    except Exception:  # query unavailable -> conservative static cap
        cap = 48 << 20
    cap = max(32 << 20, min(cap, 48 << 20))

    # --- Row-tile selection --------------------------------------------------
    # Grow the row tile until the double-buffered footprint hits the budget so
    # W2 [H, vocab] (dominant HBM stream) is streamed as few times as possible,
    # ideally exactly once per call.
    fixed = (2 * num_inputs * num_hiddens * mm_b          # W1 (double buffered)
             + 2 * num_hiddens * vt * mm_b                # W2 tile
             + 2 * 8 * (3 * num_hiddens + vt) * 4         # b1/gamma/beta/b2 (sublane-padded)
             + (2 << 20))                                 # Mosaic internal slack
    per_row = (2 * num_inputs * mm_b                      # x tile
               + 2 * vt * out_b                           # out tile
               + num_hiddens * mm_b)                      # h scratch (single buffer)
    budget = max(16 << 20, cap - (4 << 20))
    rt_max = max(8, (budget - fixed) // per_row)

    m_ceil = _round_up(M, 8)
    if row_tile is not None:
        rt = min(int(row_tile), m_ceil)
    else:
        rt = min(rt_max, m_ceil)
        if rt >= m_ceil and M > 1024:
            # v7x has 2 TensorCores: keep >= 2 "parallel" row tiles so both get
            # work; each core re-reads W2 once for its half of the rows.
            rt = _cdiv(M, 2)
    rt = max(8, _round_up(int(rt), 8))

    grid_rows = _cdiv(M, rt)
    grid_vocab = v_pad // vt
    m_pad = grid_rows * rt

    # Pad the (small, M x num_inputs) activation rows so every INPUT block is
    # full; the OUTPUT stays unpadded - Pallas masks ragged trailing blocks on
    # store, so no de-pad slice copy of the big [M, vocab] slab is needed.
    x_p = masked_x.astype(matmul_dtype)
    if m_pad != M:
        x_p = jnp.pad(x_p, ((0, m_pad - M), (0, 0)))

    est = fixed + rt * per_row
    vmem_limit = int(min(cap, max(32 << 20, est + (2 << 20))))

    kernel = functools.partial(_mlm_head_kernel, eps=eps)

    # TODO(synk): W1/b1/gamma/beta have constant index_maps; if Mosaic does not
    # keep them resident, pipeline_mode=pl.Buffered(1) would reclaim their
    # second buffer (mainly matters inside v7x's 64 MiB budget).
    out = pl.pallas_call(
        kernel,
        out_shape=jax.ShapeDtypeStruct((M, vocab_size), out_dtype),
        grid_spec=pltpu.PrefetchScalarGridSpec(
            num_scalar_prefetch=0,
            grid=(grid_rows, grid_vocab),
            in_specs=[
                pl.BlockSpec((rt, num_inputs), lambda i, j: (i, 0)),           # x rows
                pl.BlockSpec((num_inputs, num_hiddens), lambda i, j: (0, 0)),  # W1
                pl.BlockSpec((1, num_hiddens), lambda i, j: (0, 0)),           # b1
                pl.BlockSpec((1, num_hiddens), lambda i, j: (0, 0)),           # gamma
                pl.BlockSpec((1, num_hiddens), lambda i, j: (0, 0)),           # beta
                pl.BlockSpec((num_hiddens, vt), lambda i, j: (0, j)),          # W2
                pl.BlockSpec((1, vt), lambda i, j: (0, j)),                    # b2
            ],
            out_specs=pl.BlockSpec((rt, vt), lambda i, j: (i, j)),
            scratch_shapes=[pltpu.VMEM((rt, num_hiddens), matmul_dtype)],
        ),
        compiler_params=pltpu.CompilerParams(
            # vocab axis MUST stay last + "arbitrary" for the h_scratch reuse.
            dimension_semantics=("parallel", "arbitrary"),
            vmem_limit_bytes=vmem_limit,
        ),
    )(x_p, prep["w1"], prep["b1"], prep["gamma"], prep["beta"],
      prep["w2"], prep["b2"])

    return out


def mask_lm_forward(X, pred_positions, prep, *, row_tile=None, out_dtype=None):
    """Full MaskLM.forward: gather masked positions, then fused MLP head."""
    batch_size = X.shape[0]
    num_pred = pred_positions.shape[1]
    vocab_size = prep["vocab_size"]

    # Masked-token gather (plain JAX glue; tiny next to the W2/logit streams).
    # TODO(synk): fuse this ragged row gather into the kernel via scalar-
    # prefetched row indices + manual DMA, skipping the masked_X round trip.
    pos_flat = pred_positions.reshape(-1)                                  # [B*P]
    batch_idx = jnp.repeat(jnp.arange(batch_size), num_pred)               # [B*P]
    masked_X = X[batch_idx, pos_flat]                                      # [B*P, num_inputs]

    out_flat = mlm_head_pallas(masked_X, prep, row_tile=row_tile,
                               out_dtype=out_dtype)                        # [B*P, vocab]
    return out_flat.reshape(batch_size, num_pred, vocab_size)


# ---------------------------------------------------------------------------
# Pure-JAX reference + test harness
# ---------------------------------------------------------------------------
def _reference_forward(X, pred_positions, params, eps=1e-5):
    batch_size = X.shape[0]
    num_pred = pred_positions.shape[1]
    pos_flat = pred_positions.reshape(-1)
    batch_idx = jnp.repeat(jnp.arange(batch_size), num_pred)
    mx = X[batch_idx, pos_flat].reshape(batch_size, num_pred, -1)
    h = mx @ params["w1"] + params["b1"][0]
    h = jnp.maximum(h, 0.0)
    mean = jnp.mean(h, axis=-1, keepdims=True)
    var = jnp.mean((h - mean) ** 2, axis=-1, keepdims=True)
    h = (h - mean) * lax.rsqrt(var + eps)
    h = h * params["gamma"][0] + params["beta"][0]
    return h @ params["w2"] + params["b2"][0]


def _make_params(key, num_inputs, num_hiddens, vocab_size):
    k1, k2, k3, k4, k5, k6 = jax.random.split(key, 6)
    return {
        "w1": jax.random.normal(k1, (num_inputs, num_hiddens), jnp.float32) * 0.05,
        "b1": jax.random.normal(k2, (1, num_hiddens), jnp.float32) * 0.01,
        "gamma": 1.0 + 0.1 * jax.random.normal(k5, (1, num_hiddens), jnp.float32),
        "beta": 0.05 * jax.random.normal(k6, (1, num_hiddens), jnp.float32),
        "w2": jax.random.normal(k3, (num_hiddens, vocab_size), jnp.float32) * 0.05,
        "b2": jax.random.normal(k4, (1, vocab_size), jnp.float32) * 0.01,
    }


if __name__ == "__main__":
    key = jax.random.PRNGKey(0)

    # ---- Test 1: f32 matmul path, exact-math check vs reference ------------
    batch_size, seq_len, num_inputs, num_hiddens = 2, 16, 32, 32
    vocab_size, num_pred = 256, 4

    k0, k1, k2 = jax.random.split(key, 3)
    X = jax.random.normal(k0, (batch_size, seq_len, num_inputs), jnp.float32)
    pred_positions = jax.random.randint(
        k1, (batch_size, num_pred), 0, seq_len, dtype=jnp.int32)
    params = _make_params(k2, num_inputs, num_hiddens, vocab_size)

    prep = prepare_mlm_head_params(params, matmul_dtype=jnp.float32)
    out = mask_lm_forward(X, pred_positions, prep)
    out = jax.block_until_ready(out)
    ref = _reference_forward(X, pred_positions, params)
    assert out.shape == (batch_size, num_pred, vocab_size), out.shape
    assert out.dtype == jnp.float32
    assert jnp.allclose(out, ref, atol=1e-4, rtol=1e-4), "f32 mismatch vs reference"

    # ---- Test 2: default bf16 path, ragged (non-tile-aligned) shapes -------
    # Exercises: multi vocab tiles, masked ragged stores on both the row and
    # vocab axes (unpadded out_shape), bf16 output.
    vocab_size2, num_pred2 = 3000, 10
    k3, k4, k5 = jax.random.split(k2, 3)
    X2 = jax.random.normal(k3, (batch_size, seq_len, num_inputs), jnp.float32)
    pred_positions2 = jax.random.randint(
        k4, (batch_size, num_pred2), 0, seq_len, dtype=jnp.int32)
    params2 = _make_params(k5, num_inputs, num_hiddens, vocab_size2)

    prep2 = prepare_mlm_head_params(params2, matmul_dtype=jnp.bfloat16)
    out2 = mask_lm_forward(X2, pred_positions2, prep2)
    out2 = jax.block_until_ready(out2)
    ref2 = _reference_forward(X2, pred_positions2, params2)
    assert out2.shape == (batch_size, num_pred2, vocab_size2), out2.shape
    assert jnp.allclose(out2.astype(jnp.float32), ref2, atol=3e-2, rtol=3e-2), \
        "bf16 mismatch vs reference"

    print("KERNEL_OK")
</pallas_src>

<mosaic_0001>
module attributes {stable_mosaic.version = 11 : i64} {
  func.func @_mlm_head_kernel(%arg0: i32, %arg1: i32, %arg2: memref<8x32xf32, #tpu.memory_space<vmem>>, %arg3: memref<32x32xf32, #tpu.memory_space<vmem>>, %arg4: memref<1x32xf32, #tpu.memory_space<vmem>>, %arg5: memref<1x32xf32, #tpu.memory_space<vmem>>, %arg6: memref<1x32xf32, #tpu.memory_space<vmem>>, %arg7: memref<32x256xf32, #tpu.memory_space<vmem>>, %arg8: memref<1x256xf32, #tpu.memory_space<vmem>>, %arg9: memref<8x256xf32, #tpu.memory_space<vmem>>, %arg10: memref<8x32xf32, #tpu.memory_space<vmem>>) attributes {dimension_semantics = [#tpu.dimension_semantics<parallel>, #tpu.dimension_semantics<arbitrary>], iteration_bounds = array<i64: 1, 1>, scalar_prefetch = 0 : i64, scratch_operands = 1 : i64, tpu.core_type = #tpu.core_type<tc>, window_params = [{transform_indices = @transform_0, window_bounds = array<i64: 8, 32>}, {pipeline_mode = #tpu.pipeline_mode<synchronous>, transform_indices = @transform_1, window_bounds = array<i64: 32, 32>}, {pipeline_mode = #tpu.pipeline_mode<synchronous>, transform_indices = @transform_2, window_bounds = array<i64: 1, 32>}, {pipeline_mode = #tpu.pipeline_mode<synchronous>, transform_indices = @transform_3, window_bounds = array<i64: 1, 32>}, {pipeline_mode = #tpu.pipeline_mode<synchronous>, transform_indices = @transform_4, window_bounds = array<i64: 1, 32>}, {transform_indices = @transform_5, window_bounds = array<i64: 32, 256>}, {transform_indices = @transform_6, window_bounds = array<i64: 1, 256>}, {transform_indices = @transform_7, window_bounds = array<i64: 8, 256>}]} {
    %c0_i32 = arith.constant 0 : i32
    %0 = arith.cmpi eq, %arg1, %c0_i32 : i32
    %1 = arith.extui %0 : i1 to i32
    %c0_i32_0 = arith.constant 0 : i32
    %2 = arith.cmpi ne, %1, %c0_i32_0 : i32
    scf.if %2 {
      %c0_8 = arith.constant 0 : index
      %c0_9 = arith.constant 0 : index
      %10 = vector.load %arg2[%c0_8, %c0_9] : memref<8x32xf32, #tpu.memory_space<vmem>>, vector<8x32xf32>
      %c0_10 = arith.constant 0 : index
      %c0_11 = arith.constant 0 : index
      %11 = vector.load %arg3[%c0_10, %c0_11] : memref<32x32xf32, #tpu.memory_space<vmem>>, vector<32x32xf32>
      %cst_12 = arith.constant dense<0.000000e+00> : vector<8x32xf32>
      %12 = tpu.matmul %10, %11, %cst_12 {dimension_numbers = #tpu.dot_dimension_numbers<[1], [0], [0], [1], [0, 0, 1, 1], [], []>} : vector<8x32xf32>, vector<32x32xf32>, vector<8x32xf32> -> vector<8x32xf32>
      %c0_13 = arith.constant 0 : index
      %c0_14 = arith.constant 0 : index
      %13 = vector.load %arg4[%c0_13, %c0_14] : memref<1x32xf32, #tpu.memory_space<vmem>>, vector<1x32xf32>
      %14 = vector.broadcast %13 : vector<1x32xf32> to vector<8x32xf32>
      %15 = arith.addf %12, %14 : vector<8x32xf32>
      %cst_15 = arith.constant 0.000000e+00 : f32
      %16 = vector.broadcast %cst_15 : f32 to vector<8x32xf32>
      %17 = arith.maximumf %15, %16 : vector<8x32xf32>
      %cst_16 = arith.constant dense<0.000000e+00> : vector<8xf32>
      %18 = vector.multi_reduction <add>, %17, %cst_16 [1] : vector<8x32xf32> to vector<8xf32>
      %19 = vector.shape_cast %18 : vector<8xf32> to vector<8x1xf32>
      %cst_17 = arith.constant 3.200000e+01 : f32
      %20 = vector.broadcast %cst_17 : f32 to vector<8x1xf32>
      %21 = arith.divf %19, %20 : vector<8x1xf32>
      %22 = vector.broadcast %21 : vector<8x1xf32> to vector<8x32xf32>
      %23 = arith.subf %17, %22 : vector<8x32xf32>
      %24 = vector.broadcast %21 : vector<8x1xf32> to vector<8x32xf32>
      %25 = arith.subf %17, %24 : vector<8x32xf32>
      %26 = arith.mulf %23, %25 : vector<8x32xf32>
      %cst_18 = arith.constant dense<0.000000e+00> : vector<8xf32>
      %27 = vector.multi_reduction <add>, %26, %cst_18 [1] : vector<8x32xf32> to vector<8xf32>
      %28 = vector.shape_cast %27 : vector<8xf32> to vector<8x1xf32>
      %cst_19 = arith.constant 3.200000e+01 : f32
      %29 = vector.broadcast %cst_19 : f32 to vector<8x1xf32>
      %30 = arith.divf %28, %29 : vector<8x1xf32>
      %31 = vector.broadcast %21 : vector<8x1xf32> to vector<8x32xf32>
      %32 = arith.subf %17, %31 : vector<8x32xf32>
      %cst_20 = arith.constant 9.99999974E-6 : f32
      %33 = vector.broadcast %cst_20 : f32 to vector<8x1xf32>
      %34 = arith.addf %30, %33 : vector<8x1xf32>
      %35 = math.rsqrt %34 : vector<8x1xf32>
      %36 = vector.broadcast %35 : vector<8x1xf32> to vector<8x32xf32>
      %37 = arith.mulf %32, %36 : vector<8x32xf32>
      %c0_21 = arith.constant 0 : index
      %c0_22 = arith.constant 0 : index
      %38 = vector.load %arg5[%c0_21, %c0_22] : memref<1x32xf32, #tpu.memory_space<vmem>>, vector<1x32xf32>
      %39 = vector.broadcast %38 : vector<1x32xf32> to vector<8x32xf32>
      %40 = arith.mulf %37, %39 : vector<8x32xf32>
      %c0_23 = arith.constant 0 : index
      %c0_24 = arith.constant 0 : index
      %41 = vector.load %arg6[%c0_23, %c0_24] : memref<1x32xf32, #tpu.memory_space<vmem>>, vector<1x32xf32>
      %42 = vector.broadcast %41 : vector<1x32xf32> to vector<8x32xf32>
      %43 = arith.addf %40, %42 : vector<8x32xf32>
      %c0_25 = arith.constant 0 : index
      %c0_26 = arith.constant 0 : index
      %44 = vector.load %arg10[%c0_25, %c0_26] : memref<8x32xf32, #tpu.memory_space<vmem>>, vector<8x32xf32>
      tpu.vector_store %arg10[%c0_25, %c0_26], %43 {strides = array<i32>} : memref<8x32xf32, #tpu.memory_space<vmem>>, vector<8x32xf32>,
    } else {
    }
    %c0 = arith.constant 0 : index
    %c0_1 = arith.constant 0 : index
    %3 = vector.load %arg10[%c0, %c0_1] : memref<8x32xf32, #tpu.memory_space<vmem>>, vector<8x32xf32>
    %c0_2 = arith.constant 0 : index
    %c0_3 = arith.constant 0 : index
    %4 = vector.load %arg7[%c0_2, %c0_3] : memref<32x256xf32, #tpu.memory_space<vmem>>, vector<32x256xf32>
    %cst = arith.constant dense<0.000000e+00> : vector<8x256xf32>
    %5 = tpu.matmul %3, %4, %cst {dimension_numbers = #tpu.dot_dimension_numbers<[1], [0], [0], [1], [0, 0, 1, 1], [], []>} : vector<8x32xf32>, vector<32x256xf32>, vector<8x256xf32> -> vector<8x256xf32>
    %c0_4 = arith.constant 0 : index
    %c0_5 = arith.constant 0 : index
    %6 = vector.load %arg8[%c0_4, %c0_5] : memref<1x256xf32, #tpu.memory_space<vmem>>, vector<1x256xf32>
    %7 = vector.broadcast %6 : vector<1x256xf32> to vector<8x256xf32>
    %8 = arith.addf %5, %7 : vector<8x256xf32>
    %c0_6 = arith.constant 0 : index
    %c0_7 = arith.constant 0 : index
    %9 = vector.load %arg9[%c0_6, %c0_7] : memref<8x256xf32, #tpu.memory_space<vmem>>, vector<8x256xf32>
    tpu.vector_store %arg9[%c0_6, %c0_7], %8 {strides = array<i32>} : memref<8x256xf32, #tpu.memory_space<vmem>>, vector<8x256xf32>,
    return
  }
  func.func @transform_0(%arg0: i32, %arg1: i32) -> (i32, i32) {
    %c0_i32 = arith.constant 0 : i32
    %c0_i32_0 = arith.constant 0 : i32
    return %arg0, %c0_i32 : i32, i32
  }
  func.func @transform_1(%arg0: i32, %arg1: i32) -> (i32, i32) {
    %c0_i32 = arith.constant 0 : i32
    %c0_i32_0 = arith.constant 0 : i32
    %c0_i32_1 = arith.constant 0 : i32
    return %c0_i32, %c0_i32_0 : i32, i32
  }
  func.func @transform_2(%arg0: i32, %arg1: i32) -> (i32, i32) {
    %c0_i32 = arith.constant 0 : i32
    %c0_i32_0 = arith.constant 0 : i32
    %c0_i32_1 = arith.constant 0 : i32
    return %c0_i32, %c0_i32_0 : i32, i32
  }
  func.func @transform_3(%arg0: i32, %arg1: i32) -> (i32, i32) {
    %c0_i32 = arith.constant 0 : i32
    %c0_i32_0 = arith.constant 0 : i32
    %c0_i32_1 = arith.constant 0 : i32
    return %c0_i32, %c0_i32_0 : i32, i32
  }
  func.func @transform_4(%arg0: i32, %arg1: i32) -> (i32, i32) {
    %c0_i32 = arith.constant 0 : i32
    %c0_i32_0 = arith.constant 0 : i32
    %c0_i32_1 = arith.constant 0 : i32
    return %c0_i32, %c0_i32_0 : i32, i32
  }
  func.func @transform_5(%arg0: i32, %arg1: i32) -> (i32, i32) {
    %c0_i32 = arith.constant 0 : i32
    %c0_i32_0 = arith.constant 0 : i32
    return %c0_i32, %arg1 : i32, i32
  }
  func.func @transform_6(%arg0: i32, %arg1: i32) -> (i32, i32) {
    %c0_i32 = arith.constant 0 : i32
    %c0_i32_0 = arith.constant 0 : i32
    return %c0_i32, %arg1 : i32, i32
  }
  func.func @transform_7(%arg0: i32, %arg1: i32) -> (i32, i32) {
    %c0_i32 = arith.constant 0 : i32
    return %arg0, %arg1 : i32, i32
  }
}

</mosaic_0001>

<llo_original>
// kernel: tpu_custom_call.1
$region0: #{tpu_custom_call.1}
  #allocation0 [shape = 'u32[]', space=smem, size = 0x4, offset = 0x4, fixed_abs, tag = 'smem constant byte address 0x4 - core index']
  #allocation1 [shape = 'u32[144,128]{1,0:T(1,128)}', space=vmem, size = 0x12000, scoped, tag = 'internal scratch']
  #allocation2 [shape = 'f32[8,32]{1,0:T(8,128)}', space=vmem, size = 0x1000, scoped, tag = 'scratch operand']
  %s0 = inlined_call_operand.hbm [shape: f32[8,32], index: 0, kind: input, shape index: {}]
  %s1 = inlined_call_operand.hbm [shape: f32[32,32], index: 1, kind: input, shape index: {}]
  %s2 = inlined_call_operand.vmem [shape: f32[1,32], index: 2, kind: input, shape index: {}]
  %s3 = inlined_call_operand.vmem [shape: f32[1,32], index: 3, kind: input, shape index: {}]
  %s4 = inlined_call_operand.vmem [shape: f32[1,32], index: 4, kind: input, shape index: {}]
  %s5 = inlined_call_operand.hbm [shape: f32[32,256], index: 5, kind: input, shape index: {}]
  %s6 = inlined_call_operand.vmem [shape: f32[1,256], index: 6, kind: input, shape index: {}]
  %s7 = inlined_call_operand.hbm [shape: f32[8,256], index: 7, kind: output, shape index: {}]
  %s8 = sld [smem:[#allocation0]]
  $region54: #{tpu_custom_call.1} parent=0
    _
  %s10 = ssub.s32 1, %s8
  %s11 = scalar_select 0, %s10, %s8
  $region1: #{tpu_custom_call.1} parent=0
    #allocation3 [shape = 'u8[4096]{0}', space=vmem, size = 0x1000, scoped, tag = 'input window, operand 0, single buffered']
    #allocation4 [shape = 's32[1]{0}', space=sflag, size = 0x4, scoped, tag = 'scoped memory for tpu_custom_call.1']
    #allocation5 [shape = 's32[1]{0}', space=sflag, size = 0x4, scoped, tag = 'scoped memory for tpu_custom_call.1']
    #allocation6 [shape = 'u8[16384]{0}', space=vmem, size = 0x4000, scoped, tag = 'input window, operand 1, single buffered']
    #allocation7 [shape = 's32[1]{0}', space=sflag, size = 0x4, scoped, tag = 'scoped memory for tpu_custom_call.1']
    #allocation8 [shape = 'u8[32768]{0}', space=vmem, size = 0x8000, scoped, tag = 'input window, operand 5, single buffered']
    #allocation9 [shape = 'u8[8192]{0}', space=vmem, size = 0x2000, scoped, tag = 'output window, operand 0, single buffered']
    %12 = vsyncpa [#allocation4], 0
    %13 = vsyncpa [#allocation7], 0
    %14 = vsyncpa [#allocation5], 0
    // Predicated region
    $region2: #{tpu_custom_call.1} parent=1 // pred_check
      _
    $region3: #{tpu_custom_call.1} parent=1 // pred_check_branch
      %16 = sbr.rel (0) target = $region5
    $region4: #{tpu_custom_call.1} parent=1 // pred_region
      %s18 = ssub.s32 128, 128
      %19 = vsyncadd [#allocation4], %s18
      %s21 = sshll.u32 [#allocation3], 4
      %s22 = int_to_ptr.vmem [resolvable:$true] %s21
      %24 = dma.hbm_to_vmem [thread:$0]  %s0, 128, %s22, [#allocation4]
    $region5: #{tpu_custom_call.1} parent=1 // pred_fallthru
      _
    // Predicated region
    $region6: #{tpu_custom_call.1} parent=1 // pred_check
      _
    $region7: #{tpu_custom_call.1} parent=1 // pred_check_branch
      %26 = sbr.rel (0) target = $region9
    $region8: #{tpu_custom_call.1} parent=1 // pred_region
      %s28 = ssub.s32 512, 512
      %29 = vsyncadd [#allocation7], %s28
      %s30 = sshll.u32 [#allocation6], 4
      %s31 = int_to_ptr.vmem [resolvable:$true] %s30
      %36 = dma.hbm_to_vmem [thread:$0]  %s1, 512, %s31, [#allocation7], 128, 128, 8
    $region9: #{tpu_custom_call.1} parent=1 // pred_fallthru
      _
    // Predicated region
    $region10: #{tpu_custom_call.1} parent=1 // pred_check
      _
    $region11: #{tpu_custom_call.1} parent=1 // pred_check_branch
      %38 = sbr.rel (0) target = $region13
    $region12: #{tpu_custom_call.1} parent=1 // pred_region
      _
    $region13: #{tpu_custom_call.1} parent=1 // pred_fallthru
      _
    // Predicated region
    $region14: #{tpu_custom_call.1} parent=1 // pred_check
      _
    $region15: #{tpu_custom_call.1} parent=1 // pred_check_branch
      %40 = sbr.rel (0) target = $region17
    $region16: #{tpu_custom_call.1} parent=1 // pred_region
      _
    $region17: #{tpu_custom_call.1} parent=1 // pred_fallthru
      _
    // Predicated region
    $region18: #{tpu_custom_call.1} parent=1 // pred_check
      _
    $region19: #{tpu_custom_call.1} parent=1 // pred_check_branch
      %42 = sbr.rel (0) target = $region21
    $region20: #{tpu_custom_call.1} parent=1 // pred_region
      _
    $region21: #{tpu_custom_call.1} parent=1 // pred_fallthru
      _
    // Predicated region
    $region22: #{tpu_custom_call.1} parent=1 // pred_check
      _
    $region23: #{tpu_custom_call.1} parent=1 // pred_check_branch
      %44 = sbr.rel (0) target = $region25
    $region24: #{tpu_custom_call.1} parent=1 // pred_region
      %s46 = ssub.s32 1024, 1024
      %47 = vsyncadd [#allocation7], %s46
      %s48 = sshll.u32 [#allocation8], 4
      %s49 = int_to_ptr.vmem [resolvable:$true] %s48
      %54 = dma.hbm_to_vmem [thread:$0]  %s5, 1024, %s49, [#allocation7], 256, 256, 16
    $region25: #{tpu_custom_call.1} parent=1 // pred_fallthru
      _
    // Predicated region
    $region26: #{tpu_custom_call.1} parent=1 // pred_check
      _
    $region27: #{tpu_custom_call.1} parent=1 // pred_check_branch
      %56 = sbr.rel (0) target = $region29
    $region28: #{tpu_custom_call.1} parent=1 // pred_region
      _
    $region29: #{tpu_custom_call.1} parent=1 // pred_fallthru
      _
    // Predicated region
    $region30: #{tpu_custom_call.1} parent=1 // pred_check
      _
    $region31: #{tpu_custom_call.1} parent=1 // pred_check_branch
      %58 = sbr.rel (0) target = $region33
    $region32: #{tpu_custom_call.1} parent=1 // pred_region
      %59 = dma.done [#allocation4], 128
    $region33: #{tpu_custom_call.1} parent=1 // pred_fallthru
      _
    // Predicated region
    $region34: #{tpu_custom_call.1} parent=1 // pred_check
      _
    $region35: #{tpu_custom_call.1} parent=1 // pred_check_branch
      %61 = sbr.rel (0) target = $region37
    $region36: #{tpu_custom_call.1} parent=1 // pred_region
      %62 = dma.done [#allocation7], 512
    $region37: #{tpu_custom_call.1} parent=1 // pred_fallthru
      _
    // Predicated region
    $region38: #{tpu_custom_call.1} parent=1 // pred_check
      _
    $region39: #{tpu_custom_call.1} parent=1 // pred_check_branch
      %64 = sbr.rel (0) target = $region41
    $region40: #{tpu_custom_call.1} parent=1 // pred_region
      %65 = dma.done [#allocation7], 1024
    $region41: #{tpu_custom_call.1} parent=1 // pred_fallthru
      _
    %p66 = scmp.eq.s32.totalorder 0, 0
    // Predicated region
    $region42: #{tpu_custom_call.1} parent=1 // pred_check
      %p67 = pneg %p66
    $region43: #{tpu_custom_call.1} parent=1 // pred_check_branch
      %69 = sbr.rel (%p67) target = $region45
    $region44: #{tpu_custom_call.1} parent=1 // pred_region
      %v70 = vld [vmem:[#allocation3] sm:$0xff]
      %v71 = vld [vmem:[#allocation6] sm:$0xff]
      %v72 = vld [vmem:[#allocation6 + $0x8] sm:$0xff]
      %v73 = vld [vmem:[#allocation6 + $0x10] sm:$0xff]
      %v74 = vld [vmem:[#allocation6 + $0x18] sm:$0xff]
      %v75 = vld [vmem:[%s2] sm:$0x1]
      %v77 = vlaneseq
      %v78 = vshrl.u32 %v77, 7
      %v79 = vsub.s32 0, %v78
      %v80 = vrot.slane %v75, %v79
      %vm82 = vcmask 261120
      %v84 = vsel %vm82, %v70, 0
      %86 = vmatprep.subr.mxu0 0.0
      %87 = vmatpush1.msra.mxu0 0.0
      %88 = vmatprep.subr.mxu0 0.0
      %89 = vmatpush1.msra.mxu0 0.0
      %90 = vmatprep.subr.mxu0 0.0
      %91 = vmatpush1.msra.mxu0 0.0
      %92 = vmatprep.subr.mxu0 0.0
      %93 = vmatpush1.msra.mxu0 0.0
      %94 = vmatprep.subr.mxu0 0.0
      %95 = vmatpush1.msra.mxu0 0.0
      %96 = vmatprep.subr.mxu0 0.0
      %97 = vmatpush1.msra.mxu0 0.0
      %98 = vmatprep.subr.mxu0 0.0
      %99 = vmatpush1.msra.mxu0 0.0
      %100 = vmatprep.subr.mxu0 0.0
      %101 = vmatpush1.msra.mxu0 0.0
      %102 = vmatprep.subr.mxu0 0.0
      %103 = vmatpush1.msra.mxu0 0.0
      %104 = vmatprep.subr.mxu0 0.0
      %105 = vmatpush1.msra.mxu0 0.0
      %106 = vmatprep.subr.mxu0 0.0
      %107 = vmatpush1.msra.mxu0 0.0
      %108 = vmatprep.subr.mxu0 0.0
      %109 = vmatpush1.msra.mxu0 0.0
      %110 = vmatprep.subr.mxu0 0.0
      %111 = vmatpush1.msra.mxu0 %v74
      %112 = vmatprep.subr.mxu0 0.0
      %113 = vmatpush1.msra.mxu0 %v73
      %114 = vmatprep.subr.mxu0 0.0
      %115 = vmatpush1.msra.mxu0 %v72
      %116 = vmatprep.subr.mxu0 0.0
      %117 = vmatpush1.msra.mxu0 %v71
      %118 = vmatprep.subr.mxu0 0.0
      %119 = vmatpush2.msra.mxu0 0.0
      %120 = vmatprep.subr.mxu0 0.0
      %121 = vmatpush2.msra.mxu0 0.0
      %122 = vmatprep.subr.mxu0 0.0
      %123 = vmatpush2.msra.mxu0 0.0
      %124 = vmatprep.subr.mxu0 0.0
      %125 = vmatpush2.msra.mxu0 0.0
      %126 = vmatprep.subr.mxu0 0.0
      %127 = vmatpush2.msra.mxu0 0.0
      %128 = vmatprep.subr.mxu0 0.0
      %129 = vmatpush2.msra.mxu0 0.0
      %130 = vmatprep.subr.mxu0 0.0
      %131 = vmatpush2.msra.mxu0 0.0
      %132 = vmatprep.subr.mxu0 0.0
      %133 = vmatpush2.msra.mxu0 0.0
      %134 = vmatprep.subr.mxu0 0.0
      %135 = vmatpush2.msra.mxu0 0.0
      %136 = vmatprep.subr.mxu0 0.0
      %137 = vmatpush2.msra.mxu0 0.0
      %138 = vmatprep.subr.mxu0 0.0
      %139 = vmatpush2.msra.mxu0 0.0
      %140 = vmatprep.subr.mxu0 0.0
      %141 = vmatpush2.msra.mxu0 0.0
      %142 = vmatprep.subr.mxu0 0.0
      %143 = vmatpush2.msra.mxu0 0.0
      %144 = vmatprep.subr.mxu0 0.0
      %145 = vmatpush2.msra.mxu0 0.0
      %146 = vmatprep.subr.mxu0 0.0
      %147 = vmatpush2.msra.mxu0 0.0
      %148 = vmatprep.subr.mxu0 0.0
      %149 = vmatpush2.msra.mxu0 0.0
      %150 = vmatprep.mubr.f32.mxu0 0.0
      %151 = vmatmul.mubr.f32.gmra.mxu0 %v84
      %v152 = vpop.f32.mrf.mxu0
      %v153 = vadd.f32 %v80, %v152
      %v154 = vpop.f32.mrf.mxu0
      %155 = vdwg.mxu0
      %v156 = vmax.f32 %v153, 0.0
      %v157 = vsel %vm82, %v156, 0.0
      %158 = vadd.xlane.f32.xlu0 %v157
      %v159 = vpop.xlane.xlu0 %158
      %v160 = vrcp.pop 32.0
      %v161 = vmul.f32 %v159, %v160
      %v162 = vsub.f32 %v156, %v161
      %v163 = vmul.f32 %v162, %v162
      %v164 = vsel %vm82, %v163, 0.0
      %165 = vadd.xlane.f32.xlu0 %v164
      %v166 = vpop.xlane.xlu0 %165
      %v167 = vmul.f32 %v166, %v160
      %v168 = vadd.f32 %v167, 1e-05
      %v169 = vrsqrt.pop %v168
      %v170 = vmul.f32 %v162, %v169
      %v171 = vld [vmem:[%s3] sm:$0x1]
      %v173 = vlaneseq
      %v174 = vshrl.u32 %v173, 7
      %v175 = vsub.s32 0, %v174
      %v176 = vrot.slane %v171, %v175
      %v178 = vmul.f32 %v170, %v176
      %v179 = vld [vmem:[%s4] sm:$0x1]
      %v181 = vlaneseq
      %v182 = vshrl.u32 %v181, 7
      %v183 = vsub.s32 0, %v182
      %v184 = vrot.slane %v179, %v183
      %v186 = vadd.f32 %v178, %v184
      %187 = vst.msk [vmem:[#allocation2] sm:$0xff] %vm82, %v186
    $region45: #{tpu_custom_call.1} parent=1 // pred_fallthru
      _
    %v188 = vld [vmem:[#allocation2] sm:$0xff]
    %v189 = vld [vmem:[#allocation8] sm:$0xff]
    %v190 = vld [vmem:[#allocation8 + $0x8] sm:$0xff]
    %v191 = vld [vmem:[#allocation8 + $0x10] sm:$0xff]
    %v192 = vld [vmem:[#allocation8 + $0x18] sm:$0xff]
    %v193 = vld [vmem:[#allocation8 + $0x20] sm:$0xff]
    %v194 = vld [vmem:[#allocation8 + $0x28] sm:$0xff]
    %v195 = vld [vmem:[#allocation8 + $0x30] sm:$0xff]
    %v196 = vld [vmem:[#allocation8 + $0x38] sm:$0xff]
    %v197 = vld [vmem:[%s6] sm:$0x3]
    %v199 = vlaneseq
    %v200 = vshrl.u32 %v199, 7
    %v201 = vsub.s32 0, %v200
    %v202 = vrot.slane %v197, %v201
    %v203 = vlaneseq
    %v204 = vshrl.u32 %v203, 7
    %v205 = vsub.s32 1, %v204
    %v206 = vrot.slane %v197, %v205
    %vm209 = vcmask 261120
    %v211 = vsel %vm209, %v188, 0
    %213 = vmatprep.subr.mxu0 0.0
    %214 = vmatpush1.msra.mxu0 0.0
    %215 = vmatprep.subr.mxu0 0.0
    %216 = vmatpush1.msra.mxu0 0.0
    %217 = vmatprep.subr.mxu0 0.0
    %218 = vmatpush1.msra.mxu0 0.0
    %219 = vmatprep.subr.mxu0 0.0
    %220 = vmatpush1.msra.mxu0 0.0
    %221 = vmatprep.subr.mxu0 0.0
    %222 = vmatpush1.msra.mxu0 0.0
    %223 = vmatprep.subr.mxu0 0.0
    %224 = vmatpush1.msra.mxu0 0.0
    %225 = vmatprep.subr.mxu0 0.0
    %226 = vmatpush1.msra.mxu0 0.0
    %227 = vmatprep.subr.mxu0 0.0
    %228 = vmatpush1.msra.mxu0 0.0
    %229 = vmatprep.subr.mxu0 0.0
    %230 = vmatpush1.msra.mxu0 0.0
    %231 = vmatprep.subr.mxu0 0.0
    %232 = vmatpush1.msra.mxu0 0.0
    %233 = vmatprep.subr.mxu0 0.0
    %234 = vmatpush1.msra.mxu0 0.0
    %235 = vmatprep.subr.mxu0 0.0
    %236 = vmatpush1.msra.mxu0 0.0
    %237 = vmatprep.subr.mxu0 %v196
    %238 = vmatpush1.msra.mxu0 %v195
    %239 = vmatprep.subr.mxu0 %v194
    %240 = vmatpush1.msra.mxu0 %v193
    %241 = vmatprep.subr.mxu0 %v192
    %242 = vmatpush1.msra.mxu0 %v191
    %243 = vmatprep.subr.mxu0 %v190
    %244 = vmatpush1.msra.mxu0 %v189
    %245 = vmatprep.subr.mxu0 0.0
    %246 = vmatpush2.msra.mxu0 0.0
    %247 = vmatprep.subr.mxu0 0.0
    %248 = vmatpush2.msra.mxu0 0.0
    %249 = vmatprep.subr.mxu0 0.0
    %250 = vmatpush2.msra.mxu0 0.0
    %251 = vmatprep.subr.mxu0 0.0
    %252 = vmatpush2.msra.mxu0 0.0
    %253 = vmatprep.subr.mxu0 0.0
    %254 = vmatpush2.msra.mxu0 0.0
    %255 = vmatprep.subr.mxu0 0.0
    %256 = vmatpush2.msra.mxu0 0.0
    %257 = vmatprep.subr.mxu0 0.0
    %258 = vmatpush2.msra.mxu0 0.0
    %259 = vmatprep.subr.mxu0 0.0
    %260 = vmatpush2.msra.mxu0 0.0
    %261 = vmatprep.subr.mxu0 0.0
    %262 = vmatpush2.msra.mxu0 0.0
    %263 = vmatprep.subr.mxu0 0.0
    %264 = vmatpush2.msra.mxu0 0.0
    %265 = vmatprep.subr.mxu0 0.0
    %266 = vmatpush2.msra.mxu0 0.0
    %267 = vmatprep.subr.mxu0 0.0
    %268 = vmatpush2.msra.mxu0 0.0
    %269 = vmatprep.subr.mxu0 0.0
    %270 = vmatpush2.msra.mxu0 0.0
    %271 = vmatprep.subr.mxu0 0.0
    %272 = vmatpush2.msra.mxu0 0.0
    %273 = vmatprep.subr.mxu0 0.0
    %274 = vmatpush2.msra.mxu0 0.0
    %275 = vmatprep.subr.mxu0 0.0
    %276 = vmatpush2.msra.mxu0 0.0
    %277 = vmatprep.mubr.f32.mxu0 0.0
    %278 = vmatmul.mubr.f32.gmra.mxu0 %v211
    %v279 = vpop.f32.mrf.mxu0
    %v280 = vadd.f32 %v202, %v279
    %v281 = vpop.f32.mrf.mxu0
    %v282 = vadd.f32 %v206, %v281
    %283 = vdwg.mxu0
    %284 = vst [vmem:[#allocation9] sm:$0xff] %v280
    %285 = vst [vmem:[#allocation9 + $0x8] sm:$0xff] %v282
    // Predicated region
    $region46: #{tpu_custom_call.1} parent=1 // pred_check
      _
    $region47: #{tpu_custom_call.1} parent=1 // pred_check_branch
      %287 = sbr.rel (0) target = $region49
    $region48: #{tpu_custom_call.1} parent=1 // pred_region
      %s289 = ssub.s32 256, 256
      %290 = vsyncadd [#allocation5], %s289
      %s292 = sshll.u32 [#allocation9], 4
      %s293 = int_to_ptr.vmem [resolvable:$true] %s292
      %295 = dma.vmem_to_hbm [thread:$0]  %s293, 256, %s7, [#allocation5]
    $region49: #{tpu_custom_call.1} parent=1 // pred_fallthru
      _
    // Predicated region
    $region50: #{tpu_custom_call.1} parent=1 // pred_check
      _
    $region51: #{tpu_custom_call.1} parent=1 // pred_check_branch
      %297 = sbr.rel (0) target = $region53
    $region52: #{tpu_custom_call.1} parent=1 // pred_region
      %298 = dma.done [#allocation5], 256
    $region53: #{tpu_custom_call.1} parent=1 // pred_fallthru
      _
    %299 = vsyncpa [#allocation4], 1
    %300 = vsyncpa [#allocation7], 1
    %301 = vsyncpa [#allocation5], 1

</llo_original>
